<compile_context>
chip_gen: v7x
topology: tpu7x:2x2x1
jax: 0.10.0
libtpu: 0.0.40
codegen_flags: <defaults>
</compile_context>

<pallas_src>
import functools
import math

import jax
import jax.numpy as jnp
from jax.experimental import pallas as pl
from jax.experimental.pallas import tpu as pltpu


_VMEM_LIMIT = 48 * 1024 * 1024


def _round_up(v, m):
    return ((v + m - 1) // m) * m


def _divisor_at_most(n, cap):
    cap = max(1, min(n, cap))
    for d in range(cap, 0, -1):
        if n % d == 0:
            return d
    return 1


def _pick_tn(np_):
    if np_ % 256 == 0:
        return 256
    if np_ % 128 == 0:
        return 128
    return np_          # "equal full dim" blocks are legal (e.g. cout=64)


def _pick_gemm_tm(M):
    for t in (256, 128, 64, 32, 16, 8):
        if M >= t and M % t == 0:
            return t, M
    tm = min(256, _round_up(M, 8))
    return tm, _round_up(M, tm)


def _pick_conv_tm(M):
    if M <= 512:
        return M          # single tile; "equal full dim" is always legal
    for t in range(512, 7, -8):
        if M % t == 0:
            return t
    return M


# ----------------------------------------------------------------------------
# Pallas kernels
# ----------------------------------------------------------------------------
def _gemm_shift_act_kernel(x_ref, w_ref, shift_ref, o_ref, *, act):
    """One (tm,K)x(K,tn) bf16 GEMM tile, f32 accumulate, + folded-BN shift + act."""
    acc = jnp.dot(x_ref[...], w_ref[...], preferred_element_type=jnp.float32)
    y = acc + shift_ref[...]
    if act == "relu":
        y = jnp.maximum(y, 0.0)
    o_ref[...] = y.astype(o_ref.dtype)


def gemm_shift_act(x, w, shift, *, act, out_dtype=jnp.bfloat16):
    """y = act(x @ w + shift). x:(M,K) bf16, w:(K,Np) bf16 (BN scale folded in)."""
    M, K = x.shape
    Np = w.shape[1]
    tn = _pick_tn(Np)
    tm, Mp = _pick_gemm_tm(M)
    xp = x if Mp == M else jnp.pad(x, ((0, Mp - M), (0, 0)))
    out = pl.pallas_call(
        functools.partial(_gemm_shift_act_kernel, act=act),
        out_shape=jax.ShapeDtypeStruct((Mp, Np), out_dtype),
        grid_spec=pltpu.PrefetchScalarGridSpec(
            num_scalar_prefetch=0,
            grid=(Mp // tm, Np // tn),
            in_specs=[
                pl.BlockSpec((tm, K), lambda i, j: (i, 0)),   # reused across j
                pl.BlockSpec((K, tn), lambda i, j: (0, j)),
                pl.BlockSpec((1, tn), lambda i, j: (0, j)),
            ],
            out_specs=pl.BlockSpec((tm, tn), lambda i, j: (i, j)),
        ),
        compiler_params=pltpu.CompilerParams(
            dimension_semantics=("parallel", "parallel"),
            vmem_limit_bytes=_VMEM_LIMIT),
    )(xp.astype(jnp.bfloat16), w, shift)
    return out if Mp == M else out[:M]


def _conv_same_kernel(xf_ref, w_ref, shift_ref, o_ref, *, kh, kw, W, pad, cin, act):
    """Direct kxk stride-1 SAME conv on a VMEM-resident flattened padded image.

    xf_ref: (1, (H+2*(pad+1))*W, cin) bf16 — padded image, flattened over (H, W).
    Each kernel tap (ki, kj) is a contiguous row-slice shifted by (ki+1)*W + kj-pad;
    W-boundary wrap-around contributions are masked out by output column index.
    """
    tm = o_ref.shape[1]
    tn = o_ref.shape[2]
    m0 = pl.program_id(2) * tm
    row = jax.lax.broadcasted_iota(jnp.int32, (tm, 1), 0) + m0
    wo = row % W
    acc = jnp.zeros((tm, tn), jnp.float32)
    for ki in range(kh):
        for kj in range(kw):
            start = m0 + (ki + 1) * W + (kj - pad)
            patch = xf_ref[0, pl.ds(start, tm), :]                 # (tm, cin) bf16
            sw = kj - pad
            if sw != 0:
                valid = (wo + sw >= 0) & (wo + sw < W)
                patch = patch * valid.astype(patch.dtype)
            q = ki * kw + kj
            wq = w_ref[pl.ds(q * cin, cin), :]                     # (cin, tn)
            acc = acc + jnp.dot(patch, wq, preferred_element_type=jnp.float32)
    y = acc + shift_ref[...]
    if act == "relu":
        y = jnp.maximum(y, 0.0)
    o_ref[0] = y.astype(o_ref.dtype)


def conv_same_direct(x, cbn, *, act):
    """kxk stride-1 SAME conv (+folded BN shift + act) without im2col."""
    N, H, W, C = x.shape
    k = cbn["k"]
    p = (k - 1) // 2
    Np = cbn["w"].shape[1]
    # pad H by p+1 on each side (the extra row keeps all shifted row-slices
    # in-bounds); W is handled by masking, so no W pad and no im2col blow-up.
    pt = p + 1
    xp = jnp.pad(x, ((0, 0), (pt, pt), (0, 0), (0, 0)))
    Lp = (H + 2 * pt) * W
    xf = xp.reshape(N, Lp, C)          # free (contiguous) reshape
    M = H * W
    tm = _pick_conv_tm(M)
    tn = _pick_tn(Np)
    # NOTE: the whole padded image (Lp*C bf16) sits in VMEM per grid step; for the
    # bottleneck conv2 layers this is <= ~0.5 MiB even at ImageNet resolutions.
    out = pl.pallas_call(
        functools.partial(_conv_same_kernel, kh=k, kw=k, W=W, pad=p, cin=C, act=act),
        out_shape=jax.ShapeDtypeStruct((N, M, Np), jnp.bfloat16),
        grid_spec=pltpu.PrefetchScalarGridSpec(
            num_scalar_prefetch=0,
            grid=(N, Np // tn, M // tm),
            in_specs=[
                pl.BlockSpec((1, Lp, C), lambda n, j, i: (n, 0, 0)),   # 1 DMA / image
                pl.BlockSpec((k * k * C, tn), lambda n, j, i: (0, j)),  # 1 DMA / (n,j)
                pl.BlockSpec((1, tn), lambda n, j, i: (0, j)),
            ],
            out_specs=pl.BlockSpec((1, tm, tn), lambda n, j, i: (n, i, j)),
        ),
        compiler_params=pltpu.CompilerParams(
            dimension_semantics=("parallel", "parallel", "parallel"),
            vmem_limit_bytes=_VMEM_LIMIT),
    )(xf, cbn["w"], cbn["shift"])
    return out.reshape(N, H, W, Np)


def _se_gate_kernel(x_ref, w1_ref, b1_ref, w2_ref, b2_ref, g_ref, pooled, *, inv_hw):
    """Spatially tiled global-avg-pool + batched squeeze/excite FCs -> gates (N,C)."""
    t = pl.program_id(0)

    @pl.when(t == 0)
    def _():
        pooled[...] = jnp.zeros_like(pooled)

    xb = x_ref[...].astype(jnp.float32)            # (N, th, W, C)
    pooled[...] += jnp.sum(jnp.sum(xb, axis=1), axis=1)

    @pl.when(t == pl.num_programs(0) - 1)
    def _():
        p = (pooled[...] * inv_hw).astype(jnp.bfloat16)                       # (N, C)
        h = jnp.dot(p, w1_ref[...], preferred_element_type=jnp.float32) + b1_ref[...]
        h = jnp.maximum(h, 0.0).astype(jnp.bfloat16)                          # (N, Cr)
        s = jnp.dot(h, w2_ref[...], preferred_element_type=jnp.float32) + b2_ref[...]
        g_ref[...] = jax.nn.sigmoid(s).astype(g_ref.dtype)                    # (N, C)


def se_gates(x, se):
    N, H, W, C = x.shape
    Cr = se["w1"].shape[1]
    th = _divisor_at_most(H, max(1, (1 << 20) // max(1, N * W * C * 2)))
    return pl.pallas_call(
        functools.partial(_se_gate_kernel, inv_hw=1.0 / (H * W)),
        out_shape=jax.ShapeDtypeStruct((N, C), jnp.bfloat16),
        grid_spec=pltpu.PrefetchScalarGridSpec(
            num_scalar_prefetch=0,
            grid=(H // th,),
            in_specs=[
                pl.BlockSpec((N, th, W, C), lambda t: (0, t, 0, 0)),
                pl.BlockSpec((C, Cr), lambda t: (0, 0)),
                pl.BlockSpec((1, Cr), lambda t: (0, 0)),
                pl.BlockSpec((Cr, C), lambda t: (0, 0)),
                pl.BlockSpec((1, C), lambda t: (0, 0)),
            ],
            out_specs=pl.BlockSpec((N, C), lambda t: (0, 0)),
            scratch_shapes=[pltpu.VMEM((N, C), jnp.float32)],
        ),
        compiler_params=pltpu.CompilerParams(
            dimension_semantics=("arbitrary",), vmem_limit_bytes=_VMEM_LIMIT),
    )(x, se["w1"], se["b1"], se["w2"], se["b2"])


def _se_apply_kernel(x_ref, r_ref, g_ref, o_ref):
    """out = relu(x * gate + residual) on a spatial tile."""
    g = g_ref[...].astype(jnp.float32)             # (1, 1, 1, C)
    y = x_ref[...].astype(jnp.float32) * g + r_ref[...].astype(jnp.float32)
    o_ref[...] = jnp.maximum(y, 0.0).astype(o_ref.dtype)


def se_apply(x, res, gates):
    N, H, W, C = x.shape
    g4 = gates.reshape(N, 1, 1, C)
    th = _divisor_at_most(H, max(1, (1 << 21) // max(1, W * C * 2 * 3)))
    return pl.pallas_call(
        _se_apply_kernel,
        out_shape=jax.ShapeDtypeStruct((N, H, W, C), jnp.bfloat16),
        grid_spec=pltpu.PrefetchScalarGridSpec(
            num_scalar_prefetch=0,
            grid=(N, H // th),
            in_specs=[
                pl.BlockSpec((1, th, W, C), lambda n, t: (n, t, 0, 0)),
                pl.BlockSpec((1, th, W, C), lambda n, t: (n, t, 0, 0)),
                pl.BlockSpec((1, 1, 1, C), lambda n, t: (n, 0, 0, 0)),
            ],
            out_specs=pl.BlockSpec((1, th, W, C), lambda n, t: (n, t, 0, 0)),
        ),
        compiler_params=pltpu.CompilerParams(
            dimension_semantics=("parallel", "parallel"),
            vmem_limit_bytes=_VMEM_LIMIT),
    )(x, res, g4)


def _head_kernel(x_ref, w_ref, b_ref, o_ref, pooled, *, inv_hw):
    """Spatially tiled global-avg-pool + last_linear (num_classes padded to 128)."""
    t = pl.program_id(0)

    @pl.when(t == 0)
    def _():
        pooled[...] = jnp.zeros_like(pooled)

    xb = x_ref[...].astype(jnp.float32)
    pooled[...] += jnp.sum(jnp.sum(xb, axis=1), axis=1)

    @pl.when(t == pl.num_programs(0) - 1)
    def _():
        p = (pooled[...] * inv_hw).astype(jnp.bfloat16)
        o_ref[...] = (jnp.dot(p, w_ref[...], preferred_element_type=jnp.float32)
                      + b_ref[...])


def head_forward(x, hp):
    N, H, W, C = x.shape
    NCp = hp["w"].shape[1]
    th = _divisor_at_most(H, max(1, (1 << 20) // max(1, N * W * C * 2)))
    out = pl.pallas_call(
        functools.partial(_head_kernel, inv_hw=1.0 / (H * W)),
        out_shape=jax.ShapeDtypeStruct((N, NCp), jnp.float32),
        grid_spec=pltpu.PrefetchScalarGridSpec(
            num_scalar_prefetch=0,
            grid=(H // th,),
            in_specs=[
                pl.BlockSpec((N, th, W, C), lambda t: (0, t, 0, 0)),
                pl.BlockSpec((C, NCp), lambda t: (0, 0)),
                pl.BlockSpec((1, NCp), lambda t: (0, 0)),
            ],
            out_specs=pl.BlockSpec((N, NCp), lambda t: (0, 0)),
            scratch_shapes=[pltpu.VMEM((N, C), jnp.float32)],
        ),
        compiler_params=pltpu.CompilerParams(
            dimension_semantics=("arbitrary",), vmem_limit_bytes=_VMEM_LIMIT),
    )(x, hp["w"], hp["b"])
    return out[:, :hp["nc"]]


# ----------------------------------------------------------------------------
# Glue: conv dispatch, im2col fallback (layer0 only), max-pool
# ----------------------------------------------------------------------------
def _conv_im2col(x, cbn, *, stride, padding, act):
    """Strided kxk conv via im2col + GEMM (only used for layer0; cin is tiny)."""
    k = cbn["k"]
    cout = cbn["cout"]
    N, H, W, C = x.shape
    Ho = (H + 2 * padding - k) // stride + 1
    Wo = (W + 2 * padding - k) // stride + 1
    xp = jnp.pad(x, ((0, 0), (padding, padding), (padding, padding), (0, 0)))
    cols = []
    for i in range(k):
        for j in range(k):
            cols.append(xp[:, i: i + stride * (Ho - 1) + 1: stride,
                           j: j + stride * (Wo - 1) + 1: stride, :])
    patches = jnp.stack(cols, axis=3).reshape(N * Ho * Wo, k * k * C)
    y = gemm_shift_act(patches, cbn["w"], cbn["shift"], act=act)
    return y.reshape(N, Ho, Wo, cout)


def conv_bn_act(x, cbn, *, stride, padding, act):
    """Conv2d(bias=False) + folded BatchNorm + activation."""
    k = cbn["k"]
    N, H, W, C = x.shape
    if k == 1:
        xs = x if stride == 1 else x[:, ::stride, ::stride, :]
        Ho, Wo = xs.shape[1], xs.shape[2]
        cout = cbn["w"].shape[1]
        y = gemm_shift_act(xs.reshape(N * Ho * Wo, C), cbn["w"], cbn["shift"], act=act)
        return y.reshape(N, Ho, Wo, cout)
    if stride == 1 and 2 * padding == k - 1:
        return conv_same_direct(x, cbn, act=act)
    return _conv_im2col(x, cbn, stride=stride, padding=padding, act=act)


def maxpool_3x3_s2_ceil(x):
    """nn.MaxPool2d(3, stride=2, ceil_mode=True) on NHWC (glue, not a hot path)."""
    N, H, W, C = x.shape
    k, s = 3, 2
    Ho = -(-(H - k) // s) + 1
    Wo = -(-(W - k) // s) + 1
    pad_h = max(0, (Ho - 1) * s + k - H)
    pad_w = max(0, (Wo - 1) * s + k - W)
    neg_inf = jnp.array(-jnp.inf, x.dtype)
    return jax.lax.reduce_window(
        x, neg_inf, jax.lax.max,
        window_dimensions=(1, k, k, 1),
        window_strides=(1, s, s, 1),
        padding=((0, 0), (0, pad_h), (0, pad_w), (0, 0)))


# ----------------------------------------------------------------------------
# Deterministic parameter initialization (synthetic; BN folded & packed at init)
# ----------------------------------------------------------------------------
def _conv_bn_init(key, k, cin, cout):
    kw_, kg, kb, km, kv = jax.random.split(key, 5)
    fan_in = k * k * cin
    w = jax.random.normal(kw_, (k, k, cin, cout), jnp.float32) * math.sqrt(2.0 / fan_in)
    gamma = jax.random.uniform(kg, (cout,), jnp.float32, 0.5, 1.5)
    beta = 0.1 * jax.random.normal(kb, (cout,), jnp.float32)
    mean = 0.1 * jax.random.normal(km, (cout,), jnp.float32)
    var = jax.random.uniform(kv, (cout,), jnp.float32, 0.5, 1.5)
    scale = gamma / jnp.sqrt(var + 1e-5)           # folded (eval-mode) BatchNorm
    shift = beta - mean * scale
    wf = (w * scale[None, None, None, :]).reshape(k * k * cin, cout).astype(jnp.bfloat16)
    return {"w": wf, "shift": shift.reshape(1, -1), "k": k, "cin": cin, "cout": cout}


def _se_init(key, c, reduction):
    k1, k2, k3, k4 = jax.random.split(key, 4)
    cr = c // reduction
    return {
        "w1": (jax.random.normal(k1, (c, cr), jnp.float32)
               * math.sqrt(1.0 / c)).astype(jnp.bfloat16),
        "b1": (0.1 * jax.random.normal(k2, (cr,), jnp.float32)).reshape(1, -1),
        "w2": (jax.random.normal(k3, (cr, c), jnp.float32)
               * math.sqrt(1.0 / cr)).astype(jnp.bfloat16),
        "b2": (0.1 * jax.random.normal(k4, (c,), jnp.float32)).reshape(1, -1),
    }


def _head_init(key, c_final, nc):
    kw_, kb_ = jax.random.split(key)
    w = jax.random.normal(kw_, (c_final, nc), jnp.float32) * math.sqrt(1.0 / c_final)
    b = 0.1 * jax.random.normal(kb_, (nc,), jnp.float32)
    ncp = _round_up(nc, 128)            # lane-dense output store; slice at the end
    wp = jnp.pad(w, ((0, 0), (0, ncp - nc))).astype(jnp.bfloat16)
    bp = jnp.pad(b, (0, ncp - nc)).reshape(1, -1)
    return {"w": wp, "b": bp, "nc": nc}


def init_senet_params(key, cfg):
    keys = iter(jax.random.split(key, 64))
    nk = lambda: next(keys)
    params = {}
    inplanes = cfg["inplanes"]

    if cfg["input_3x3"]:
        params["layer0"] = [
            {"cbn": _conv_bn_init(nk(), 3, 3, 64), "stride": 2, "pad": 1},
            {"cbn": _conv_bn_init(nk(), 3, 64, 64), "stride": 1, "pad": 1},
            {"cbn": _conv_bn_init(nk(), 3, 64, inplanes), "stride": 1, "pad": 1},
        ]
    else:
        params["layer0"] = [
            {"cbn": _conv_bn_init(nk(), 7, 3, inplanes), "stride": 2, "pad": 3},
        ]

    exp = cfg["expansion"]
    layer_defs = [
        (64, cfg["layers"][0], 1, 1, 0),
        (128, cfg["layers"][1], 2, cfg["downsample_kernel_size"], cfg["downsample_padding"]),
        (256, cfg["layers"][2], 2, cfg["downsample_kernel_size"], cfg["downsample_padding"]),
        (512, cfg["layers"][3], 2, cfg["downsample_kernel_size"], cfg["downsample_padding"]),
    ]
    layers = []
    for planes, nblocks, stride, dk, dp in layer_defs:
        layer = []
        for i in range(nblocks):
            s = stride if i == 0 else 1
            blk = {
                "conv1": _conv_bn_init(nk(), 1, inplanes, planes),
                "conv2": _conv_bn_init(nk(), 3, planes, planes),
                "conv3": _conv_bn_init(nk(), 1, planes, planes * exp),
                "se": _se_init(nk(), planes * exp, cfg["reduction"]),
            }
            if i == 0 and (s != 1 or inplanes != planes * exp):
                blk["downsample"] = _conv_bn_init(nk(), dk, inplanes, planes * exp)
            layer.append({"p": blk, "stride": s, "down_pad": dp})
            inplanes = planes * exp
        layers.append(layer)
    params["layers"] = layers
    params["head"] = _head_init(nk(), 512 * exp, cfg["num_classes"])
    return params


# ----------------------------------------------------------------------------
# Forward pass (SEResNetBottleneck semantics: stride lives on conv1 1x1)
# ----------------------------------------------------------------------------
def bottleneck_forward(x, blk):
    p, s = blk["p"], blk["stride"]
    residual = x
    out = conv_bn_act(x, p["conv1"], stride=s, padding=0, act="relu")
    out = conv_bn_act(out, p["conv2"], stride=1, padding=1, act="relu")
    out = conv_bn_act(out, p["conv3"], stride=1, padding=0, act="none")
    if "downsample" in p:
        residual = conv_bn_act(x, p["downsample"], stride=s,
                               padding=blk["down_pad"], act="none")
    gates = se_gates(out, p["se"])                 # batched squeeze/excite (Pallas)
    return se_apply(out, residual, gates)          # gate*x + residual + ReLU (Pallas)


def senet_forward(params, x_nchw):
    x = jnp.transpose(x_nchw, (0, 2, 3, 1)).astype(jnp.bfloat16)   # NCHW -> NHWC bf16
    for stage in params["layer0"]:
        x = conv_bn_act(x, stage["cbn"], stride=stage["stride"],
                        padding=stage["pad"], act="relu")
    x = maxpool_3x3_s2_ceil(x)
    for layer in params["layers"]:
        for blk in layer:
            x = bottleneck_forward(x, blk)
    return head_forward(x, params["head"])   # global avg-pool + (no dropout) + last_linear


# ----------------------------------------------------------------------------
if __name__ == "__main__":
    # SE-ResNet style configuration (SEResNetBottleneck, expansion=4), small depth.
    cfg = dict(
        expansion=4, layers=[1, 1, 1, 1], groups=1, reduction=16,
        dropout_p=None, inplanes=64, input_3x3=False,
        downsample_kernel_size=1, downsample_padding=0, num_classes=16,
    )

    root = jax.random.PRNGKey(0)
    k_param, k_input = jax.random.split(root)
    params = init_senet_params(k_param, cfg)

    x = jax.random.normal(k_input, (2, 3, 64, 64), jnp.float32)   # NCHW input

    logits = senet_forward(params, x)
    logits = jax.block_until_ready(logits)
    assert logits.shape == (2, cfg["num_classes"])
    assert bool(jnp.isfinite(logits).all())
    print("KERNEL_OK")
</pallas_src>

<mosaic_0001>
module attributes {stable_mosaic.version = 11 : i64} {
  func.func @_gemm_shift_act_kernel(%arg0: i32, %arg1: i32, %arg2: memref<256x147xbf16, #tpu.memory_space<vmem>>, %arg3: memref<147x64xbf16, #tpu.memory_space<vmem>>, %arg4: memref<1x64xf32, #tpu.memory_space<vmem>>, %arg5: memref<256x64xbf16, #tpu.memory_space<vmem>>) attributes {dimension_semantics = [#tpu.dimension_semantics<parallel>, #tpu.dimension_semantics<parallel>], iteration_bounds = array<i64: 8, 1>, scalar_prefetch = 0 : i64, scratch_operands = 0 : i64, tpu.core_type = #tpu.core_type<tc>, window_params = [{transform_indices = @transform_0, window_bounds = array<i64: 256, 147>}, {transform_indices = @transform_1, window_bounds = array<i64: 147, 64>}, {transform_indices = @transform_2, window_bounds = array<i64: 1, 64>}, {transform_indices = @transform_3, window_bounds = array<i64: 256, 64>}]} {
    %c0 = arith.constant 0 : index
    %c0_0 = arith.constant 0 : index
    %0 = vector.load %arg2[%c0, %c0_0] : memref<256x147xbf16, #tpu.memory_space<vmem>>, vector<256x147xbf16>
    %c0_1 = arith.constant 0 : index
    %c0_2 = arith.constant 0 : index
    %1 = vector.load %arg3[%c0_1, %c0_2] : memref<147x64xbf16, #tpu.memory_space<vmem>>, vector<147x64xbf16>
    %cst = arith.constant dense<0.000000e+00> : vector<256x64xf32>
    %2 = tpu.matmul %0, %1, %cst {dimension_numbers = #tpu.dot_dimension_numbers<[1], [0], [0], [1], [0, 0, 1, 1], [], []>} : vector<256x147xbf16>, vector<147x64xbf16>, vector<256x64xf32> -> vector<256x64xf32>
    %c0_3 = arith.constant 0 : index
    %c0_4 = arith.constant 0 : index
    %3 = vector.load %arg4[%c0_3, %c0_4] : memref<1x64xf32, #tpu.memory_space<vmem>>, vector<1x64xf32>
    %4 = vector.broadcast %3 : vector<1x64xf32> to vector<256x64xf32>
    %5 = arith.addf %2, %4 : vector<256x64xf32>
    %cst_5 = arith.constant 0.000000e+00 : f32
    %6 = vector.broadcast %cst_5 : f32 to vector<256x64xf32>
    %7 = arith.maximumf %5, %6 : vector<256x64xf32>
    %8 = arith.truncf %7 : vector<256x64xf32> to vector<256x64xbf16>
    %c0_6 = arith.constant 0 : index
    %c0_7 = arith.constant 0 : index
    %9 = vector.load %arg5[%c0_6, %c0_7] : memref<256x64xbf16, #tpu.memory_space<vmem>>, vector<256x64xbf16>
    tpu.vector_store %arg5[%c0_6, %c0_7], %8 {strides = array<i32>} : memref<256x64xbf16, #tpu.memory_space<vmem>>, vector<256x64xbf16>,
    return
  }
  func.func @transform_0(%arg0: i32, %arg1: i32) -> (i32, i32) {
    %c0_i32 = arith.constant 0 : i32
    %c0_i32_0 = arith.constant 0 : i32
    return %arg0, %c0_i32 : i32, i32
  }
  func.func @transform_1(%arg0: i32, %arg1: i32) -> (i32, i32) {
    %c0_i32 = arith.constant 0 : i32
    %c0_i32_0 = arith.constant 0 : i32
    return %c0_i32, %arg1 : i32, i32
  }
  func.func @transform_2(%arg0: i32, %arg1: i32) -> (i32, i32) {
    %c0_i32 = arith.constant 0 : i32
    %c0_i32_0 = arith.constant 0 : i32
    return %c0_i32, %arg1 : i32, i32
  }
  func.func @transform_3(%arg0: i32, %arg1: i32) -> (i32, i32) {
    %c0_i32 = arith.constant 0 : i32
    return %arg0, %arg1 : i32, i32
  }
}

</mosaic_0001>

<llo_original>
// kernel: tpu_custom_call.1
$region0: #{tpu_custom_call.1}
  #allocation0 [shape = 'u32[]', space=smem, size = 0x4, offset = 0x4, fixed_abs, tag = 'smem constant byte address 0x4 - core index']
  #allocation1 [shape = 'u32[144,128]{1,0:T(1,128)}', space=vmem, size = 0x12000, scoped, tag = 'internal scratch']
  %s0 = inlined_call_operand.vmem [shape: bf16[2048,147], index: 0, kind: input, shape index: {}]
  %s1 = inlined_call_operand.vmem [shape: bf16[147,64], index: 1, kind: input, shape index: {}]
  %s2 = inlined_call_operand.vmem [shape: f32[1,64], index: 2, kind: input, shape index: {}]
  %s3 = inlined_call_operand.vmem [shape: bf16[2048,64], index: 3, kind: output, shape index: {}]
  %s4 = sld [smem:[#allocation0]]
  $region45: #{tpu_custom_call.1} parent=0
    _
  %s6 = ssub.s32 1, %s4
  %s7 = scalar_select 0, %s6, %s4
  loop: start=0, step=1, limit=10
  $region2: #{tpu_custom_call.1} parent=0 // loop_pre_header
    _
  $region3: #{tpu_custom_call.1} parent=0 // loop_header
    %s9 = sphi 0, %s13
    %p10 = scmp.ge.s32.totalorder %s9, 10
    %s16 = sphi 0, %s28
    %s17 = sphi 0, %s24
    %s18 = sphi 0, %s16
    %s19 = sphi 0, %s17
    %s20 = sphi 0, %s18
    %s21 = sphi 0, %s19
    %s31 = sphi 0, %s33
    %s34 = sphi 0, %s31
    %s35 = sphi 0, %s34
    %s51 = sphi 0, %s35
    %s57 = sphi 0, %s59
    %s60 = sphi 0, %s57
    %s61 = sphi 0, %s60
    %s77 = sphi 0, %s61
    %s83 = sphi 0, %s85
    %s86 = sphi 0, %s83
    %s87 = sphi 0, %s86
    %s103 = sphi 0, %s87
    %s111 = sphi 0, %s113
    %s114 = sphi 0, %s111
    %s115 = sphi 0, %s114
    %s131 = sphi 0, %s115
  $region4: #{tpu_custom_call.1} parent=0 // loop_header_branch
    %12 = sbr.rel (%p10) target = $region8
  $region5: #{tpu_custom_call.1} parent=0 // loop_body
    %s14 = ssub.s32 %s9, 1
    %s15 = ssub.s32 %s9, 2
    %s22 = sadd.s32 1, %s17
    %p23 = scmp.ge.s32.totalorder %s22, 1
    %s24 = scalar_select %p23, 0, %s22
    %s25 = sadd.s32 1, %s16
    %s26 = scalar_select %p23, %s25, %s16
    %p27 = scmp.ge.s32.totalorder %s26, 8
    %s28 = scalar_select %p27, 0, %s26
    %s29 = ssub.s32 %s16, %s28
    %p30 = scmp.eq.s32.totalorder %s29, 0
    %s32 = sadd.s32 %s31, 1
    %s33 = scalar_select %p30, %s31, %s32
    %p36 = pneg %p30
    %p37 = scmp.eq.s32.totalorder %s9, 7
    %p38 = por %p36, %p37
    %p39 = scmp.ne.s32.totalorder %s31, %s34
    %p40 = scmp.eq.s32.totalorder %s9, 0
    %p41 = por %p39, %p40
    %p42 = scmp.ne.s32.totalorder %s31, %s34
    %p43 = scmp.eq.s32.totalorder %s14, 7
    %p44 = por %p42, %p43
    %p45 = scmp.ne.s32.totalorder %s34, %s35
    %p46 = scmp.eq.s32.totalorder %s14, 0
    %p47 = por %p45, %p46
    %p48 = scmp.ne.s32.totalorder %s34, %s35
    %p49 = scmp.eq.s32.totalorder %s15, 7
    %p50 = por %p48, %p49
    %p52 = scmp.ne.s32.totalorder %s35, %s51
    %p53 = scmp.eq.s32.totalorder %s15, 0
    %p54 = por %p52, %p53
    %s55 = ssub.s32 %s17, %s24
    %p56 = scmp.eq.s32.totalorder %s55, 0
    %s58 = sadd.s32 %s57, 1
    %s59 = scalar_select %p56, %s57, %s58
    %p62 = pneg %p56
    %p63 = scmp.eq.s32.totalorder %s9, 7
    %p64 = por %p62, %p63
    %p65 = scmp.ne.s32.totalorder %s57, %s60
    %p66 = scmp.eq.s32.totalorder %s9, 0
    %p67 = por %p65, %p66
    %p68 = scmp.ne.s32.totalorder %s57, %s60
    %p69 = scmp.eq.s32.totalorder %s14, 7
    %p70 = por %p68, %p69
    %p71 = scmp.ne.s32.totalorder %s60, %s61
    %p72 = scmp.eq.s32.totalorder %s14, 0
    %p73 = por %p71, %p72
    %p74 = scmp.ne.s32.totalorder %s60, %s61
    %p75 = scmp.eq.s32.totalorder %s15, 7
    %p76 = por %p74, %p75
    %p78 = scmp.ne.s32.totalorder %s61, %s77
    %p79 = scmp.eq.s32.totalorder %s15, 0
    %p80 = por %p78, %p79
    %s81 = ssub.s32 %s17, %s24
    %p82 = scmp.eq.s32.totalorder %s81, 0
    %s84 = sadd.s32 %s83, 1
    %s85 = scalar_select %p82, %s83, %s84
    %p88 = pneg %p82
    %p89 = scmp.eq.s32.totalorder %s9, 7
    %p90 = por %p88, %p89
    %p91 = scmp.ne.s32.totalorder %s83, %s86
    %p92 = scmp.eq.s32.totalorder %s9, 0
    %p93 = por %p91, %p92
    %p94 = scmp.ne.s32.totalorder %s83, %s86
    %p95 = scmp.eq.s32.totalorder %s14, 7
    %p96 = por %p94, %p95
    %p97 = scmp.ne.s32.totalorder %s86, %s87
    %p98 = scmp.eq.s32.totalorder %s14, 0
    %p99 = por %p97, %p98
    %p100 = scmp.ne.s32.totalorder %s86, %s87
    %p101 = scmp.eq.s32.totalorder %s15, 7
    %p102 = por %p100, %p101
    %p104 = scmp.ne.s32.totalorder %s87, %s103
    %p105 = scmp.eq.s32.totalorder %s15, 0
    %p106 = por %p104, %p105
    %s107 = ssub.s32 %s16, %s28
    %s108 = ssub.s32 %s17, %s24
    %s109 = sor.u32 %s107, %s108
    %p110 = scmp.eq.s32.totalorder %s109, 0
    %s112 = sadd.s32 %s111, 1
    %s113 = scalar_select %p110, %s111, %s112
    %p116 = pneg %p110
    %p117 = scmp.eq.s32.totalorder %s9, 7
    %p118 = por %p116, %p117
    %p119 = scmp.ne.s32.totalorder %s111, %s114
    %p120 = scmp.eq.s32.totalorder %s9, 0
    %p121 = por %p119, %p120
    %p122 = scmp.ne.s32.totalorder %s111, %s114
    %p123 = scmp.eq.s32.totalorder %s14, 7
    %p124 = por %p122, %p123
    %p125 = scmp.ne.s32.totalorder %s114, %s115
    %p126 = scmp.eq.s32.totalorder %s14, 0
    %p127 = por %p125, %p126
    %p128 = scmp.ne.s32.totalorder %s114, %s115
    %p129 = scmp.eq.s32.totalorder %s15, 7
    %p130 = por %p128, %p129
    %p132 = scmp.ne.s32.totalorder %s115, %s131
    %p133 = scmp.eq.s32.totalorder %s15, 0
    %p134 = por %p132, %p133
    %p135 = scmp.le.s32.totalorder 1, %s9
    %p136 = scmp.lt.s32.totalorder %s9, 9
    %p137 = pnand %p135, %p136
    %p138 = pneg %p137
    // Predicated region
    $region9: #{tpu_custom_call.1} parent=5 // pred_check
      _
    $region10: #{tpu_custom_call.1} parent=5 // pred_check_branch
      %140 = sbr.rel (%p137) target = $region12
    $region11: #{tpu_custom_call.1} parent=5 // pred_region
      %s141 = ssub.s32 %s9, 1
      // Predicated region
      $region13: #{tpu_custom_call.1} parent=11 // pred_check
        %p142 = pneg %p73
      $region14: #{tpu_custom_call.1} parent=11 // pred_check_branch
        %144 = sbr.rel (%p142) target = $region16
      $region15: #{tpu_custom_call.1} parent=11 // pred_region
        %p145 = scmp.lt.s32.totalorder %s19, 0
        %s146 = scalar_select %p145, %s19, 0
        %s147 = smul.addr %s146, 4
        %s148 = scalar_lea.vmem %s1, %s147
      $region16: #{tpu_custom_call.1} parent=11 // pred_fallthru
        _
      // Predicated region
      $region17: #{tpu_custom_call.1} parent=11 // pred_check
        %p149 = pneg %p99
      $region18: #{tpu_custom_call.1} parent=11 // pred_check_branch
        %151 = sbr.rel (%p149) target = $region20
      $region19: #{tpu_custom_call.1} parent=11 // pred_region
        %p152 = scmp.lt.s32.totalorder %s19, 0
        %s153 = scalar_select %p152, %s19, 0
        %s154 = scalar_lea.vmem %s2, %s153
      $region20: #{tpu_custom_call.1} parent=11 // pred_fallthru
        _
    $region12: #{tpu_custom_call.1} parent=5 // pred_fallthru
      _
    %p155 = scmp.lt.s32.totalorder %s9, 8
    // Predicated region
    $region21: #{tpu_custom_call.1} parent=5 // pred_check
      %p156 = pneg %p155
    $region22: #{tpu_custom_call.1} parent=5 // pred_check_branch
      %158 = sbr.rel (%p156) target = $region24
    $region23: #{tpu_custom_call.1} parent=5 // pred_region
      // Predicated region
      $region25: #{tpu_custom_call.1} parent=23 // pred_check
        %p159 = pneg %p41
      $region26: #{tpu_custom_call.1} parent=23 // pred_check_branch
        %161 = sbr.rel (%p159) target = $region28
      $region27: #{tpu_custom_call.1} parent=23 // pred_region
        %s162 = smul.u32 32, %s16
        %p163 = scmp.lt.s32.totalorder %s162, 255
        %s164 = scalar_select %p163, %s162, 255
        %s165 = smul.addr %s164, 2
        %s166 = smul.addr %s165, 4
        %s167 = scalar_lea.vmem %s0, %s166
        %s168 = smul.u32 32, %s16
      $region28: #{tpu_custom_call.1} parent=23 // pred_fallthru
        _
    $region24: #{tpu_custom_call.1} parent=5 // pred_fallthru
      _
    %p169 = scmp.le.s32.totalorder 1, %s9
    %p170 = scmp.lt.s32.totalorder %s9, 9
    %p171 = pnand %p169, %p170
    %p172 = pneg %p171
    // Predicated region
    $region29: #{tpu_custom_call.1} parent=5 // pred_check
      _
    $region30: #{tpu_custom_call.1} parent=5 // pred_check_branch
      %174 = sbr.rel (%p171) target = $region32
    $region31: #{tpu_custom_call.1} parent=5 // pred_region
      %s175 = ssub.s32 %s9, 1
      %s176 = smul.u32 32, %s18
      %p177 = scmp.lt.s32.totalorder %s176, 255
      %s178 = scalar_select %p177, %s176, 255
      %s179 = smul.addr %s178, 2
      %s180 = smul.addr %s179, 4
      %s181 = scalar_lea.vmem %s0, %s180
      %p182 = pneg %p47
      %p183 = pneg %p44
      %p184 = scmp.lt.s32.totalorder %s19, 0
      %s185 = scalar_select %p184, %s19, 0
      %s186 = smul.addr %s185, 4
      %s187 = scalar_lea.vmem %s1, %s186
      %p188 = pneg %p73
      %p189 = pneg %p70
      %p190 = scmp.lt.s32.totalorder %s19, 0
      %s191 = scalar_select %p190, %s19, 0
      %s192 = scalar_lea.vmem %s2, %s191
      %p193 = pneg %p99
      %p194 = pneg %p96
      %p195 = pneg %p127
      %p196 = pneg %p124
      %s197 = smul.u32 32, %s18
      %p198 = scmp.lt.s32.totalorder %s197, 255
      %s199 = scalar_select %p198, %s197, 255
      %p200 = scmp.lt.s32.totalorder %s19, 0
      %s201 = scalar_select %p200, %s19, 0
      %s202 = sadd.s32 %s201, %s199
      %s203 = smul.addr %s202, 4
      %s204 = scalar_lea.vmem %s3, %s203
      %s205 = smul.u32 32, %s18
      %p206 = scmp.lt.s32.totalorder %s205, 255
      %s207 = scalar_select %p206, %s205, 255
      %s208 = smul.addr %s207, 2
      %s209 = smul.addr %s208, 4
      %s210 = scalar_lea.vmem %s0, %s209
      %s211 = smul.u32 32, %s18
      %p212 = scmp.lt.s32.totalorder %s19, 0
      %s213 = scalar_select %p212, %s19, 0
      %s214 = smul.addr %s213, 4
      %s215 = scalar_lea.vmem %s1, %s214
      %p216 = scmp.lt.s32.totalorder %s19, 0
      %s217 = scalar_select %p216, %s19, 0
      %s218 = scalar_lea.vmem %s2, %s217
      %s219 = smul.u32 32, %s18
      %p220 = scmp.lt.s32.totalorder %s219, 255
      %s221 = scalar_select %p220, %s219, 255
      %p222 = scmp.lt.s32.totalorder %s19, 0
      %s223 = scalar_select %p222, %s19, 0
      %s224 = sadd.s32 %s223, %s221
      %s225 = smul.addr %s224, 4
      %s226 = scalar_lea.vmem %s3, %s225
      %s227 = smul.u32 32, %s18
      %v229 = vld [vmem:[%s210] sm:$0xff]
      %v230 = vld [vmem:[%s210 + $0x8] sm:$0xff]
      %v231 = vld [vmem:[%s210 + $0x10] sm:$0xff]
      %v232 = vld [vmem:[%s210 + $0x18] sm:$0xff]
      %v233 = vld [vmem:[%s210 + $0x20] sm:$0xff]
      %v234 = vld [vmem:[%s210 + $0x28] sm:$0xff]
      %v235 = vld [vmem:[%s210 + $0x30] sm:$0xff]
      %v236 = vld [vmem:[%s210 + $0x38] sm:$0xff]
      %v237 = vld [vmem:[%s210 + $0x40] sm:$0xff]
      %v238 = vld [vmem:[%s210 + $0x48] sm:$0xff]
      %v239 = vld [vmem:[%s210 + $0x50] sm:$0xff]
      %v240 = vld [vmem:[%s210 + $0x58] sm:$0xff]
      %v241 = vld [vmem:[%s210 + $0x60] sm:$0xff]
      %v242 = vld [vmem:[%s210 + $0x68] sm:$0xff]
      %v243 = vld [vmem:[%s210 + $0x70] sm:$0xff]
      %v244 = vld [vmem:[%s210 + $0x78] sm:$0xff]
      %v245 = vld [vmem:[%s210 + $0x80] sm:$0xff]
      %v246 = vld [vmem:[%s210 + $0x88] sm:$0xff]
      %v247 = vld [vmem:[%s210 + $0x90] sm:$0xff]
      %v248 = vld [vmem:[%s210 + $0x98] sm:$0xff]
      %v249 = vld [vmem:[%s210 + $0xa0] sm:$0xff]
      %v250 = vld [vmem:[%s210 + $0xa8] sm:$0xff]
      %v251 = vld [vmem:[%s210 + $0xb0] sm:$0xff]
      %v252 = vld [vmem:[%s210 + $0xb8] sm:$0xff]
      %v253 = vld [vmem:[%s210 + $0xc0] sm:$0xff]
      %v254 = vld [vmem:[%s210 + $0xc8] sm:$0xff]
      %v255 = vld [vmem:[%s210 + $0xd0] sm:$0xff]
      %v256 = vld [vmem:[%s210 + $0xd8] sm:$0xff]
      %v257 = vld [vmem:[%s210 + $0xe0] sm:$0xff]
      %v258 = vld [vmem:[%s210 + $0xe8] sm:$0xff]
      %v259 = vld [vmem:[%s210 + $0xf0] sm:$0xff]
      %v260 = vld [vmem:[%s210 + $0xf8] sm:$0xff]
      %v261 = vld [vmem:[%s215] sm:$0xf]
      %v262 = vld [vmem:[%s215 + $0x4] sm:$0xf]
      %v263 = vld [vmem:[%s215 + $0x8] sm:$0xf]
      %v264 = vld [vmem:[%s215 + $0xc] sm:$0xf]
      %v265 = vld [vmem:[%s215 + $0x10] sm:$0xf]
      %v266 = vld [vmem:[%s215 + $0x14] sm:$0xf]
      %v267 = vld [vmem:[%s215 + $0x18] sm:$0xf]
      %v268 = vld [vmem:[%s215 + $0x1c] sm:$0xf]
      %v269 = vld [vmem:[%s215 + $0x20] sm:$0xf]
      %v270 = vld [vmem:[%s215 + $0x24] sm:$0xf]
      %v271 = vld [vmem:[%s215 + $0x28] sm:$0xf]
      %v272 = vld [vmem:[%s215 + $0x2c] sm:$0xf]
      %v273 = vld [vmem:[%s215 + $0x30] sm:$0xf]
      %v274 = vld [vmem:[%s215 + $0x34] sm:$0xf]
      %v275 = vld [vmem:[%s215 + $0x38] sm:$0xf]
      %v276 = vld [vmem:[%s215 + $0x3c] sm:$0xf]
      %v277 = vld [vmem:[%s215 + $0x40] sm:$0xf]
      %v278 = vld [vmem:[%s215 + $0x44] sm:$0xf]
      %v279 = vld [vmem:[%s215 + $0x48] sm:$0x3]
      %v280 = vld [vmem:[%s218] sm:$0x1]
      %v282 = vlaneseq
      %v283 = vshrl.u32 %v282, 7
      %v284 = vsub.s32 0, %v283
      %v285 = vrot.slane %v280, %v284
      %v319 = vunpack.c.l.b16 %v229
      %v320 = vunpack.c.h.b16 %v229
      %v321 = vunpack.c.l.b16 %v230
      %v322 = vunpack.c.h.b16 %v230
      %v323 = vunpack.c.l.b16 %v231
      %v324 = vunpack.c.h.b16 %v231
      %v325 = vunpack.c.l.b16 %v232
      %v326 = vunpack.c.h.b16 %v232
      %v327 = vunpack.c.l.b16 %v233
      %v328 = vunpack.c.h.b16 %v233
      %v329 = vunpack.c.l.b16 %v234
      %v330 = vunpack.c.h.b16 %v234
      %v331 = vunpack.c.l.b16 %v235
      %v332 = vunpack.c.h.b16 %v235
      %v333 = vunpack.c.l.b16 %v236
      %v334 = vunpack.c.h.b16 %v236
      %v335 = vunpack.c.l.b16 %v237
      %v336 = vunpack.c.h.b16 %v237
      %v337 = vunpack.c.l.b16 %v238
      %v338 = vunpack.c.h.b16 %v238
      %v339 = vunpack.c.l.b16 %v239
      %v340 = vunpack.c.h.b16 %v239
      %v341 = vunpack.c.l.b16 %v240
      %v342 = vunpack.c.h.b16 %v240
      %v343 = vunpack.c.l.b16 %v241
      %v344 = vunpack.c.h.b16 %v241
      %v345 = vunpack.c.l.b16 %v242
      %v346 = vunpack.c.h.b16 %v242
      %v347 = vunpack.c.l.b16 %v243
      %v348 = vunpack.c.h.b16 %v243
      %v349 = vunpack.c.l.b16 %v244
      %v350 = vunpack.c.h.b16 %v244
      %v351 = vunpack.c.l.b16 %v245
      %v352 = vunpack.c.h.b16 %v245
      %v353 = vunpack.c.l.b16 %v246
      %v354 = vunpack.c.h.b16 %v246
      %v355 = vunpack.c.l.b16 %v247
      %v356 = vunpack.c.h.b16 %v247
      %v357 = vunpack.c.l.b16 %v248
      %v358 = vunpack.c.h.b16 %v248
      %v359 = vunpack.c.l.b16 %v249
      %v360 = vunpack.c.h.b16 %v249
      %v361 = vunpack.c.l.b16 %v250
      %v362 = vunpack.c.h.b16 %v250
      %v363 = vunpack.c.l.b16 %v251
      %v364 = vunpack.c.h.b16 %v251
      %v365 = vunpack.c.l.b16 %v252
      %v366 = vunpack.c.h.b16 %v252
      %v367 = vunpack.c.l.b16 %v253
      %v368 = vunpack.c.h.b16 %v253
      %v369 = vunpack.c.l.b16 %v254
      %v370 = vunpack.c.h.b16 %v254
      %v371 = vunpack.c.l.b16 %v255
      %v372 = vunpack.c.h.b16 %v255
      %v373 = vunpack.c.l.b16 %v256
      %v374 = vunpack.c.h.b16 %v256
      %v375 = vunpack.c.l.b16 %v257
      %v376 = vunpack.c.h.b16 %v257
      %v377 = vunpack.c.l.b16 %v258
      %v378 = vunpack.c.h.b16 %v258
      %v379 = vunpack.c.l.b16 %v259
      %v380 = vunpack.c.h.b16 %v259
      %v381 = vunpack.c.l.b16 %v260
      %v382 = vunpack.c.h.b16 %v260
      %v383 = vpack.c.b16 %v321, %v319
      %v384 = vpack.c.b16 %v322, %v320
      %v385 = vpack.c.b16 %v325, %v323
      %v386 = vpack.c.b16 %v326, %v324
      %v387 = vpack.c.b16 %v329, %v327
      %v388 = vpack.c.b16 %v330, %v328
      %v389 = vpack.c.b16 %v333, %v331
      %v390 = vpack.c.b16 %v334, %v332
      %v391 = vpack.c.b16 %v337, %v335
      %v392 = vpack.c.b16 %v338, %v336
      %v393 = vpack.c.b16 %v341, %v339
      %v394 = vpack.c.b16 %v342, %v340
      %v395 = vpack.c.b16 %v345, %v343
      %v396 = vpack.c.b16 %v346, %v344
      %v397 = vpack.c.b16 %v349, %v347
      %v398 = vpack.c.b16 %v350, %v348
      %v399 = vpack.c.b16 %v353, %v351
      %v400 = vpack.c.b16 %v354, %v352
      %v401 = vpack.c.b16 %v357, %v355
      %v402 = vpack.c.b16 %v358, %v356
      %v403 = vpack.c.b16 %v361, %v359
      %v404 = vpack.c.b16 %v362, %v360
      %v405 = vpack.c.b16 %v365, %v363
      %v406 = vpack.c.b16 %v366, %v364
      %v407 = vpack.c.b16 %v369, %v367
      %v408 = vpack.c.b16 %v370, %v368
      %v409 = vpack.c.b16 %v373, %v371
      %v410 = vpack.c.b16 %v374, %v372
      %v411 = vpack.c.b16 %v377, %v375
      %v412 = vpack.c.b16 %v378, %v376
      %v413 = vpack.c.b16 %v381, %v379
      %v414 = vpack.c.b16 %v382, %v380
      %v450 = vunpack.c.l.b16 %v261
      %v451 = vunpack.c.l.b16 %v262
      %v452 = vunpack.c.l.b16 %v263
      %v453 = vunpack.c.l.b16 %v264
      %v454 = vunpack.c.l.b16 %v265
      %v455 = vunpack.c.l.b16 %v266
      %v456 = vunpack.c.l.b16 %v267
      %v457 = vunpack.c.l.b16 %v268
      %v458 = vunpack.c.l.b16 %v269
      %v459 = vunpack.c.l.b16 %v270
      %v460 = vunpack.c.l.b16 %v271
      %v461 = vunpack.c.l.b16 %v272
      %v462 = vunpack.c.l.b16 %v273
      %v463 = vunpack.c.l.b16 %v274
      %v464 = vunpack.c.l.b16 %v275
      %v465 = vunpack.c.l.b16 %v276
      %v466 = vunpack.c.l.b16 %v277
      %v467 = vunpack.c.l.b16 %v278
      %v468 = vunpack.c.l.b16 %v279
      %v469 = vpack.c.b16 %v451, %v450
      %v470 = vpack.c.b16 %v453, %v452
      %v471 = vpack.c.b16 %v455, %v454
      %v472 = vpack.c.b16 %v457, %v456
      %v473 = vpack.c.b16 %v459, %v458
      %v474 = vpack.c.b16 %v461, %v460
      %v475 = vpack.c.b16 %v463, %v462
      %v476 = vpack.c.b16 %v465, %v464
      %v477 = vpack.c.b16 %v467, %v466
      %v478 = vpack.c.b16 %v468, %v468
      %vm488 = vcmask 154624
      %v490 = vsel %vm488, %v384, 0
      %v493 = vsel %vm488, %v386, 0
      %v496 = vsel %vm488, %v388, 0
      %v499 = vsel %vm488, %v390, 0
      %v502 = vsel %vm488, %v392, 0
      %v505 = vsel %vm488, %v394, 0
      %v508 = vsel %vm488, %v396, 0
      %v511 = vsel %vm488, %v398, 0
      %v514 = vsel %vm488, %v400, 0
      %v517 = vsel %vm488, %v402, 0
      %v520 = vsel %vm488, %v404, 0
      %v523 = vsel %vm488, %v406, 0
      %v526 = vsel %vm488, %v408, 0
      %v529 = vsel %vm488, %v410, 0
      %v532 = vsel %vm488, %v412, 0
      %v535 = vsel %vm488, %v414, 0
      %vm537 = vcmask 1040384
      %vm538 = vcmask 1041408
      %v539 = vsel %vm537, 4294967295, 65535
      %v540 = vsel %vm538, %v539, 0
      %v542 = vand.u32 %v478, %v540
      %544 = vmatprep.subr.bf16.mxu0 0
      %545 = vmatpush1.bf16.msra.mxu0 %v469
      %546 = vmatprep.subr.bf16.mxu0 0
      %547 = vmatpush1.bf16.msra.mxu0 %v470
      %548 = vmatprep.subr.bf16.mxu0 0
      %549 = vmatpush1.bf16.msra.mxu0 %v471
      %550 = vmatprep.subr.bf16.mxu0 0
      %551 = vmatpush1.bf16.msra.mxu0 %v472
      %552 = vmatprep.subr.bf16.mxu0 0
      %553 = vmatpush1.bf16.msra.mxu0 %v473
      %554 = vmatprep.subr.bf16.mxu0 0
      %555 = vmatpush1.bf16.msra.mxu0 %v474
      %556 = vmatprep.subr.bf16.mxu0 0
      %557 = vmatpush1.bf16.msra.mxu0 %v475
      %558 = vmatprep.subr.bf16.mxu0 0
      %559 = vmatpush1.bf16.msra.mxu0 %v476
      %560 = vmatprep.subr.bf16.mxu0 0
      %561 = vmatpush1.bf16.msra.mxu0 %v477
      %562 = vmatprep.subr.bf16.mxu0 0
      %563 = vmatpush1.bf16.msra.mxu0 %v542
      %564 = vmatprep.subr.bf16.mxu0 0
      %565 = vmatpush1.bf16.msra.mxu0 0
      %566 = vmatprep.subr.bf16.mxu0 0
      %567 = vmatpush1.bf16.msra.mxu0 0
      %568 = vmatprep.subr.bf16.mxu0 0
      %569 = vmatpush1.bf16.msra.mxu0 0
      %570 = vmatprep.subr.bf16.mxu0 0
      %571 = vmatpush1.bf16.msra.mxu0 0
      %572 = vmatprep.subr.bf16.mxu0 0
      %573 = vmatpush1.bf16.msra.mxu0 0
      %574 = vmatprep.subr.bf16.mxu0 0
      %575 = vmatpush1.bf16.msra.mxu0 0
      %576 = vmatprep.mubr.bf16.mxu0 %v490
      %577 = vmatmul.mubr.bf16.gmra.mrb[0].mxu0 %v383
      %v578 = vpop.f32.mrb[0].mxu0
      %v579 = vadd.f32 %v285, %v578
      %v580 = vpop.f32.mrb[0].mxu0
      %v581 = vpop.f32.mrb[0].mxu0
      %v582 = vadd.f32 %v285, %v581
      %v583 = vpop.f32.mrb[0].mxu0
      %584 = vmatprep.mubr.bf16.mxu0 %v493
      %585 = vmatmul.mubr.bf16.gmra.mrb[0].mxu0 %v385
      %v586 = vpop.f32.mrb[0].mxu0
      %v587 = vadd.f32 %v285, %v586
      %v588 = vpop.f32.mrb[0].mxu0
      %v589 = vpop.f32.mrb[0].mxu0
      %v590 = vadd.f32 %v285, %v589
      %v591 = vpop.f32.mrb[0].mxu0
      %592 = vmatprep.mubr.bf16.mxu0 %v496
      %593 = vmatmul.mubr.bf16.gmra.mrb[0].mxu0 %v387
      %v594 = vpop.f32.mrb[0].mxu0
      %v595 = vadd.f32 %v285, %v594
      %v596 = vpop.f32.mrb[0].mxu0
      %v597 = vpop.f32.mrb[0].mxu0
      %v598 = vadd.f32 %v285, %v597
      %v599 = vpop.f32.mrb[0].mxu0
      %600 = vmatprep.mubr.bf16.mxu0 %v499
      %601 = vmatmul.mubr.bf16.gmra.mrb[0].mxu0 %v389
      %v602 = vpop.f32.mrb[0].mxu0
      %v603 = vadd.f32 %v285, %v602
      %v604 = vpop.f32.mrb[0].mxu0
      %v605 = vpop.f32.mrb[0].mxu0
      %v606 = vadd.f32 %v285, %v605
      %v607 = vpop.f32.mrb[0].mxu0
      %608 = vmatprep.mubr.bf16.mxu0 %v502
      %609 = vmatmul.mubr.bf16.gmra.mrb[0].mxu0 %v391
      %v610 = vpop.f32.mrb[0].mxu0
      %v611 = vadd.f32 %v285, %v610
      %v612 = vpop.f32.mrb[0].mxu0
      %v613 = vpop.f32.mrb[0].mxu0
      %v614 = vadd.f32 %v285, %v613
      %v615 = vpop.f32.mrb[0].mxu0
      %616 = vmatprep.mubr.bf16.mxu0 %v505
      %617 = vmatmul.mubr.bf16.gmra.mrb[0].mxu0 %v393
      %v618 = vpop.f32.mrb[0].mxu0
      %v619 = vadd.f32 %v285, %v618
      %v620 = vpop.f32.mrb[0].mxu0
      %v621 = vpop.f32.mrb[0].mxu0
      %v622 = vadd.f32 %v285, %v621
      %v623 = vpop.f32.mrb[0].mxu0
      %624 = vmatprep.mubr.bf16.mxu0 %v508
      %625 = vmatmul.mubr.bf16.gmra.mrb[0].mxu0 %v395
      %v626 = vpop.f32.mrb[0].mxu0
      %v627 = vadd.f32 %v285, %v626
      %v628 = vpop.f32.mrb[0].mxu0
      %v629 = vpop.f32.mrb[0].mxu0
      %v630 = vadd.f32 %v285, %v629
      %v631 = vpop.f32.mrb[0].mxu0
      %632 = vmatprep.mubr.bf16.mxu0 %v511
      %633 = vmatmul.mubr.bf16.gmra.mrb[0].mxu0 %v397
      %v634 = vpop.f32.mrb[0].mxu0
      %v635 = vadd.f32 %v285, %v634
      %v636 = vpop.f32.mrb[0].mxu0
      %v637 = vpop.f32.mrb[0].mxu0
      %v638 = vadd.f32 %v285, %v637
      %v639 = vpop.f32.mrb[0].mxu0
      %640 = vmatprep.mubr.bf16.mxu0 %v514
      %641 = vmatmul.mubr.bf16.gmra.mrb[0].mxu0 %v399
      %v642 = vpop.f32.mrb[0].mxu0
      %v643 = vadd.f32 %v285, %v642
      %v644 = vpop.f32.mrb[0].mxu0
      %v645 = vpop.f32.mrb[0].mxu0
      %v646 = vadd.f32 %v285, %v645
      %v647 = vpop.f32.mrb[0].mxu0
      %648 = vmatprep.mubr.bf16.mxu0 %v517
      %649 = vmatmul.mubr.bf16.gmra.mrb[0].mxu0 %v401
      %v650 = vpop.f32.mrb[0].mxu0
      %v651 = vadd.f32 %v285, %v650
      %v652 = vpop.f32.mrb[0].mxu0
      %v653 = vpop.f32.mrb[0].mxu0
      %v654 = vadd.f32 %v285, %v653
      %v655 = vpop.f32.mrb[0].mxu0
      %656 = vmatprep.mubr.bf16.mxu0 %v520
      %657 = vmatmul.mubr.bf16.gmra.mrb[0].mxu0 %v403
      %v658 = vpop.f32.mrb[0].mxu0
      %v659 = vadd.f32 %v285, %v658
      %v660 = vpop.f32.mrb[0].mxu0
      %v661 = vpop.f32.mrb[0].mxu0
      %v662 = vadd.f32 %v285, %v661
      %v663 = vpop.f32.mrb[0].mxu0
      %664 = vmatprep.mubr.bf16.mxu0 %v523
      %665 = vmatmul.mubr.bf16.gmra.mrb[0].mxu0 %v405
      %v666 = vpop.f32.mrb[0].mxu0
      %v667 = vadd.f32 %v285, %v666
      %v668 = vpop.f32.mrb[0].mxu0
      %v669 = vpop.f32.mrb[0].mxu0
      %v670 = vadd.f32 %v285, %v669
      %v671 = vpop.f32.mrb[0].mxu0
      %672 = vmatprep.mubr.bf16.mxu0 %v526
      %673 = vmatmul.mubr.bf16.gmra.mrb[0].mxu0 %v407
      %v674 = vpop.f32.mrb[0].mxu0
      %v675 = vadd.f32 %v285, %v674
      %v676 = vpop.f32.mrb[0].mxu0
      %v677 = vpop.f32.mrb[0].mxu0
      %v678 = vadd.f32 %v285, %v677
      %v679 = vpop.f32.mrb[0].mxu0
      %680 = vmatprep.mubr.bf16.mxu0 %v529
      %681 = vmatmul.mubr.bf16.gmra.mrb[0].mxu0 %v409
      %v682 = vpop.f32.mrb[0].mxu0
      %v683 = vadd.f32 %v285, %v682
      %v684 = vpop.f32.mrb[0].mxu0
      %v685 = vpop.f32.mrb[0].mxu0
      %v686 = vadd.f32 %v285, %v685
      %v687 = vpop.f32.mrb[0].mxu0
      %688 = vmatprep.mubr.bf16.mxu0 %v532
      %689 = vmatmul.mubr.bf16.gmra.mrb[0].mxu0 %v411
      %v690 = vpop.f32.mrb[0].mxu0
      %v691 = vadd.f32 %v285, %v690
      %v692 = vpop.f32.mrb[0].mxu0
      %v693 = vpop.f32.mrb[0].mxu0
      %v694 = vadd.f32 %v285, %v693
      %v695 = vpop.f32.mrb[0].mxu0
      %696 = vmatprep.mubr.bf16.mxu0 %v535
      %697 = vmatmul.mubr.bf16.gmra.mrb[0].mxu0 %v413
      %v698 = vpop.f32.mrb[0].mxu0
      %v699 = vadd.f32 %v285, %v698
      %v700 = vpop.f32.mrb[0].mxu0
      %v701 = vpop.f32.mrb[0].mxu0
      %v702 = vadd.f32 %v285, %v701
      %v703 = vpop.f32.mrb[0].mxu0
      %704 = vdwg.mxu0
      %v705 = vmax.f32 %v579, 0.0
      %v706 = vmax.f32 %v582, 0.0
      %v707 = vmax.f32 %v587, 0.0
      %v708 = vmax.f32 %v590, 0.0
      %v709 = vmax.f32 %v595, 0.0
      %v710 = vmax.f32 %v598, 0.0
      %v711 = vmax.f32 %v603, 0.0
      %v712 = vmax.f32 %v606, 0.0
      %v713 = vmax.f32 %v611, 0.0
      %v714 = vmax.f32 %v614, 0.0
      %v715 = vmax.f32 %v619, 0.0
      %v716 = vmax.f32 %v622, 0.0
      %v717 = vmax.f32 %v627, 0.0
      %v718 = vmax.f32 %v630, 0.0
      %v719 = vmax.f32 %v635, 0.0
      %v720 = vmax.f32 %v638, 0.0
      %v721 = vmax.f32 %v643, 0.0
      %v722 = vmax.f32 %v646, 0.0
      %v723 = vmax.f32 %v651, 0.0
      %v724 = vmax.f32 %v654, 0.0
      %v725 = vmax.f32 %v659, 0.0
      %v726 = vmax.f32 %v662, 0.0
      %v727 = vmax.f32 %v667, 0.0
      %v728 = vmax.f32 %v670, 0.0
      %v729 = vmax.f32 %v675, 0.0
      %v730 = vmax.f32 %v678, 0.0
      %v731 = vmax.f32 %v683, 0.0
      %v732 = vmax.f32 %v686, 0.0
      %v733 = vmax.f32 %v691, 0.0
      %v734 = vmax.f32 %v694, 0.0
      %v735 = vmax.f32 %v699, 0.0
      %v736 = vmax.f32 %v702, 0.0
      %v737 = vpack.c.bf16 %v706, %v705
      %v738 = vpack.c.bf16 %v708, %v707
      %v739 = vpack.c.bf16 %v710, %v709
      %v740 = vpack.c.bf16 %v712, %v711
      %v741 = vpack.c.bf16 %v714, %v713
      %v742 = vpack.c.bf16 %v716, %v715
      %v743 = vpack.c.bf16 %v718, %v717
      %v744 = vpack.c.bf16 %v720, %v719
      %v745 = vpack.c.bf16 %v722, %v721
      %v746 = vpack.c.bf16 %v724, %v723
      %v747 = vpack.c.bf16 %v726, %v725
      %v748 = vpack.c.bf16 %v728, %v727
      %v749 = vpack.c.bf16 %v730, %v729
      %v750 = vpack.c.bf16 %v732, %v731
      %v751 = vpack.c.bf16 %v734, %v733
      %v752 = vpack.c.bf16 %v736, %v735
      %v769 = vunpack.c.l.b16 %v737
      %v770 = vunpack.c.h.b16 %v737
      %v771 = vunpack.c.l.b16 %v738
      %v772 = vunpack.c.h.b16 %v738
      %v773 = vunpack.c.l.b16 %v739
      %v774 = vunpack.c.h.b16 %v739
      %v775 = vunpack.c.l.b16 %v740
      %v776 = vunpack.c.h.b16 %v740
      %v777 = vunpack.c.l.b16 %v741
      %v778 = vunpack.c.h.b16 %v741
      %v779 = vunpack.c.l.b16 %v742
      %v780 = vunpack.c.h.b16 %v742
      %v781 = vunpack.c.l.b16 %v743
      %v782 = vunpack.c.h.b16 %v743
      %v783 = vunpack.c.l.b16 %v744
      %v784 = vunpack.c.h.b16 %v744
      %v785 = vunpack.c.l.b16 %v745
      %v786 = vunpack.c.h.b16 %v745
      %v787 = vunpack.c.l.b16 %v746
      %v788 = vunpack.c.h.b16 %v746
      %v789 = vunpack.c.l.b16 %v747
      %v790 = vunpack.c.h.b16 %v747
      %v791 = vunpack.c.l.b16 %v748
      %v792 = vunpack.c.h.b16 %v748
      %v793 = vunpack.c.l.b16 %v749
      %v794 = vunpack.c.h.b16 %v749
      %v795 = vunpack.c.l.b16 %v750
      %v796 = vunpack.c.h.b16 %v750
      %v797 = vunpack.c.l.b16 %v751
      %v798 = vunpack.c.h.b16 %v751
      %v799 = vunpack.c.l.b16 %v752
      %v800 = vunpack.c.h.b16 %v752
      %v801 = vpack.c.b16 %v769, %v769
      %v802 = vpack.c.b16 %v770, %v770
      %v803 = vpack.c.b16 %v771, %v771
      %v804 = vpack.c.b16 %v772, %v772
      %v805 = vpack.c.b16 %v773, %v773
      %v806 = vpack.c.b16 %v774, %v774
      %v807 = vpack.c.b16 %v775, %v775
      %v808 = vpack.c.b16 %v776, %v776
      %v809 = vpack.c.b16 %v777, %v777
      %v810 = vpack.c.b16 %v778, %v778
      %v811 = vpack.c.b16 %v779, %v779
      %v812 = vpack.c.b16 %v780, %v780
      %v813 = vpack.c.b16 %v781, %v781
      %v814 = vpack.c.b16 %v782, %v782
      %v815 = vpack.c.b16 %v783, %v783
      %v816 = vpack.c.b16 %v784, %v784
      %v817 = vpack.c.b16 %v785, %v785
      %v818 = vpack.c.b16 %v786, %v786
      %v819 = vpack.c.b16 %v787, %v787
      %v820 = vpack.c.b16 %v788, %v788
      %v821 = vpack.c.b16 %v789, %v789
      %v822 = vpack.c.b16 %v790, %v790
      %v823 = vpack.c.b16 %v791, %v791
      %v824 = vpack.c.b16 %v792, %v792
      %v825 = vpack.c.b16 %v793, %v793
      %v826 = vpack.c.b16 %v794, %v794
      %v827 = vpack.c.b16 %v795, %v795
      %v828 = vpack.c.b16 %v796, %v796
      %v829 = vpack.c.b16 %v797, %v797
      %v830 = vpack.c.b16 %v798, %v798
      %v831 = vpack.c.b16 %v799, %v799
      %v832 = vpack.c.b16 %v800, %v800
      %vm865 = vcmask 519168
      %866 = vst.msk [vmem:[%s226] sm:$0xf] %vm865, %v801
      %867 = vst.msk [vmem:[%s226 + $0x4] sm:$0xf] %vm865, %v802
      %868 = vst.msk [vmem:[%s226 + $0x8] sm:$0xf] %vm865, %v803
      %869 = vst.msk [vmem:[%s226 + $0xc] sm:$0xf] %vm865, %v804
      %870 = vst.msk [vmem:[%s226 + $0x10] sm:$0xf] %vm865, %v805
      %871 = vst.msk [vmem:[%s226 + $0x14] sm:$0xf] %vm865, %v806
      %872 = vst.msk [vmem:[%s226 + $0x18] sm:$0xf] %vm865, %v807
      %873 = vst.msk [vmem:[%s226 + $0x1c] sm:$0xf] %vm865, %v808
      %874 = vst.msk [vmem:[%s226 + $0x20] sm:$0xf] %vm865, %v809
      %875 = vst.msk [vmem:[%s226 + $0x24] sm:$0xf] %vm865, %v810
      %876 = vst.msk [vmem:[%s226 + $0x28] sm:$0xf] %vm865, %v811
      %877 = vst.msk [vmem:[%s226 + $0x2c] sm:$0xf] %vm865, %v812
      %878 = vst.msk [vmem:[%s226 + $0x30] sm:$0xf] %vm865, %v813
      %879 = vst.msk [vmem:[%s226 + $0x34] sm:$0xf] %vm865, %v814
      %880 = vst.msk [vmem:[%s226 + $0x38] sm:$0xf] %vm865, %v815
      %881 = vst.msk [vmem:[%s226 + $0x3c] sm:$0xf] %vm865, %v816
      %882 = vst.msk [vmem:[%s226 + $0x40] sm:$0xf] %vm865, %v817
      %883 = vst.msk [vmem:[%s226 + $0x44] sm:$0xf] %vm865, %v818
      %884 = vst.msk [vmem:[%s226 + $0x48] sm:$0xf] %vm865, %v819
      %885 = vst.msk [vmem:[%s226 + $0x4c] sm:$0xf] %vm865, %v820
      %886 = vst.msk [vmem:[%s226 + $0x50] sm:$0xf] %vm865, %v821
      %887 = vst.msk [vmem:[%s226 + $0x54] sm:$0xf] %vm865, %v822
      %888 = vst.msk [vmem:[%s226 + $0x58] sm:$0xf] %vm865, %v823
      %889 = vst.msk [vmem:[%s226 + $0x5c] sm:$0xf] %vm865, %v824
      %890 = vst.msk [vmem:[%s226 + $0x60] sm:$0xf] %vm865, %v825
      %891 = vst.msk [vmem:[%s226 + $0x64] sm:$0xf] %vm865, %v826
      %892 = vst.msk [vmem:[%s226 + $0x68] sm:$0xf] %vm865, %v827
      %893 = vst.msk [vmem:[%s226 + $0x6c] sm:$0xf] %vm865, %v828
      %894 = vst.msk [vmem:[%s226 + $0x70] sm:$0xf] %vm865, %v829
      %895 = vst.msk [vmem:[%s226 + $0x74] sm:$0xf] %vm865, %v830
      %896 = vst.msk [vmem:[%s226 + $0x78] sm:$0xf] %vm865, %v831
      %897 = vst.msk [vmem:[%s226 + $0x7c] sm:$0xf] %vm865, %v832
      %s898 = smul.u32 32, %s18
      %p899 = scmp.lt.s32.totalorder %s898, 255
      %s900 = scalar_select %p899, %s898, 255
      %p901 = scmp.lt.s32.totalorder %s19, 0
      %s902 = scalar_select %p901, %s19, 0
      %s903 = sadd.s32 %s902, %s900
      %s904 = smul.addr %s903, 4
      %s905 = scalar_lea.vmem %s3, %s904
      // Predicated region
      $region33: #{tpu_custom_call.1} parent=31 // pred_check
        %p906 = pneg %p124
      $region34: #{tpu_custom_call.1} parent=31 // pred_check_branch
        %908 = sbr.rel (%p906) target = $region36
      $region35: #{tpu_custom_call.1} parent=31 // pred_region
        %s909 = smul.u32 32, %s18
      $region36: #{tpu_custom_call.1} parent=31 // pred_fallthru
        _
    $region32: #{tpu_custom_call.1} parent=5 // pred_fallthru
      _
    %p910 = scmp.le.s32.totalorder 2, %s9
    // Predicated region
    $region37: #{tpu_custom_call.1} parent=5 // pred_check
      %p911 = pneg %p910
    $region38: #{tpu_custom_call.1} parent=5 // pred_check_branch
      %913 = sbr.rel (%p911) target = $region40
    $region39: #{tpu_custom_call.1} parent=5 // pred_region
      %s914 = ssub.s32 %s9, 2
      // Predicated region
      $region41: #{tpu_custom_call.1} parent=39 // pred_check
        %p915 = pneg %p130
      $region42: #{tpu_custom_call.1} parent=39 // pred_check_branch
        %917 = sbr.rel (%p915) target = $region44
      $region43: #{tpu_custom_call.1} parent=39 // pred_region
        %s918 = smul.u32 32, %s20
        %p919 = scmp.lt.s32.totalorder %s918, 255
        %s920 = scalar_select %p919, %s918, 255
        %p921 = scmp.lt.s32.totalorder %s21, 0
        %s922 = scalar_select %p921, %s21, 0
        %s923 = sadd.s32 %s922, %s920
        %s924 = smul.addr %s923, 4
        %s925 = scalar_lea.vmem %s3, %s924
      $region44: #{tpu_custom_call.1} parent=39 // pred_fallthru
        _
    $region40: #{tpu_custom_call.1} parent=5 // pred_fallthru
      _
  $region6: #{tpu_custom_call.1} parent=0 // loop_footer
    %s13 = sadd.s32 1, %s9
  $region7: #{tpu_custom_call.1} parent=0 // loop_footer_branch
    %8 = sbr.rel target = $region3
  $region8: #{tpu_custom_call.1} parent=0 // loop_exit
    _

</llo_original>
